<compile_context>
chip_gen: v5e
topology: v5e:2x2
jax: 0.10.0
libtpu: 0.0.40
codegen_flags: <defaults>
</compile_context>

<pallas_src>
import functools

import jax
import jax.numpy as jnp
from jax import lax
from jax.experimental import pallas as pl
from jax.experimental.pallas import tpu as pltpu

_EPS = 1e-5  # nn.GroupNorm default

# Conservative VMEM budgets (bytes) that are safe across v5e / v6e / v7x.
_FULL_SAMPLE_BUDGET = 24 << 20   # per-grid-step working set for the 1-pass kernel
_CHUNK_STEP_BUDGET = 8 << 20     # per-grid-step working set for the chunked kernels
_VMEM_LIMIT = 48 << 20           # scoped VMEM limit handed to Mosaic


# ----------------------------------------------------------------------------
# Whole-sample path: one grid step per batch element, block = (C, H*W).
# ----------------------------------------------------------------------------
def _gn_full_kernel(x_ref, g_ref, b_ref, o_ref, *, inv_count, fused_fn):
    # x_ref: (C, HW) lane-dense block for the current sample.
    x = x_ref[...].astype(jnp.float32)

    # One-pass statistics over all of (C, H, W).
    s = jnp.sum(x)
    ss = jnp.sum(x * x)
    mean = s * inv_count
    var = ss * inv_count - mean * mean
    inv_std = lax.rsqrt(var + _EPS)

    # Fold the per-channel affine: y = x * scale + shift (2 ops per element).
    scale = g_ref[...] * inv_std            # (C, 1)
    shift = b_ref[...] - mean * scale       # (C, 1)
    y = x * scale + shift
    if fused_fn is not None:
        y = fused_fn(y)                     # elementwise epilogue (EUP slot)
    o_ref[...] = y.astype(o_ref.dtype)


def _groupnorm1_full(x3, g, b, fused_fn):
    N, C, HW = x3.shape
    kernel = functools.partial(
        _gn_full_kernel, inv_count=1.0 / (C * HW), fused_fn=fused_fn)
    return pl.pallas_call(
        kernel,
        out_shape=jax.ShapeDtypeStruct((N, C, HW), x3.dtype),
        grid_spec=pltpu.PrefetchScalarGridSpec(
            num_scalar_prefetch=0,
            grid=(N,),
            in_specs=[
                pl.BlockSpec((pl.Squeezed(), C, HW), lambda n: (n, 0, 0)),
                pl.BlockSpec((C, 1), lambda n: (0, 0)),
                pl.BlockSpec((C, 1), lambda n: (0, 0)),
            ],
            out_specs=pl.BlockSpec((pl.Squeezed(), C, HW), lambda n: (n, 0, 0)),
        ),
        compiler_params=pltpu.CompilerParams(
            dimension_semantics=("parallel",),
            vmem_limit_bytes=_VMEM_LIMIT,
        ),
    )(x3, g, b)


# ----------------------------------------------------------------------------
# Chunked path (large samples / tight VMEM): stats sweep + normalize sweep.
# ----------------------------------------------------------------------------
def _gn_stats_kernel(x_ref, g_ref, b_ref, scale_ref, shift_ref,
                     sum_ref, sumsq_ref, *, inv_count):
    t = pl.program_id(1)

    @pl.when(t == 0)
    def _():
        sum_ref[...] = jnp.zeros_like(sum_ref)
        sumsq_ref[...] = jnp.zeros_like(sumsq_ref)

    x = x_ref[...].astype(jnp.float32)                       # (C, tile_hw)
    sum_ref[...] += jnp.sum(x, axis=1, keepdims=True)        # (C, 1)
    sumsq_ref[...] += jnp.sum(x * x, axis=1, keepdims=True)  # (C, 1)

    @pl.when(t == pl.num_programs(1) - 1)
    def _():
        s = jnp.sum(sum_ref[...])
        ss = jnp.sum(sumsq_ref[...])
        mean = s * inv_count
        var = ss * inv_count - mean * mean
        inv_std = lax.rsqrt(var + _EPS)
        scale = g_ref[...] * inv_std
        scale_ref[...] = scale
        shift_ref[...] = b_ref[...] - mean * scale


def _gn_apply_kernel(x_ref, scale_ref, shift_ref, o_ref, *, fused_fn):
    x = x_ref[...].astype(jnp.float32)
    y = x * scale_ref[...] + shift_ref[...]
    if fused_fn is not None:
        y = fused_fn(y)
    o_ref[...] = y.astype(o_ref.dtype)


def _groupnorm1_chunked(x3, g, b, fused_fn, tile_hw):
    N, C, HW = x3.shape
    assert HW % tile_hw == 0, "tile_hw must divide H*W"
    n_t = HW // tile_hw

    stats_kernel = functools.partial(_gn_stats_kernel, inv_count=1.0 / (C * HW))
    scale, shift = pl.pallas_call(
        stats_kernel,
        out_shape=(jax.ShapeDtypeStruct((N, C, 1), jnp.float32),
                   jax.ShapeDtypeStruct((N, C, 1), jnp.float32)),
        grid_spec=pltpu.PrefetchScalarGridSpec(
            num_scalar_prefetch=0,
            grid=(N, n_t),
            in_specs=[
                pl.BlockSpec((pl.Squeezed(), C, tile_hw), lambda n, t: (n, 0, t)),
                pl.BlockSpec((C, 1), lambda n, t: (0, 0)),
                pl.BlockSpec((C, 1), lambda n, t: (0, 0)),
            ],
            out_specs=[
                pl.BlockSpec((pl.Squeezed(), C, 1), lambda n, t: (n, 0, 0)),
                pl.BlockSpec((pl.Squeezed(), C, 1), lambda n, t: (n, 0, 0)),
            ],
            scratch_shapes=[pltpu.VMEM((C, 1), jnp.float32),
                            pltpu.VMEM((C, 1), jnp.float32)],
        ),
        compiler_params=pltpu.CompilerParams(
            dimension_semantics=("parallel", "arbitrary"),
            vmem_limit_bytes=_VMEM_LIMIT,
        ),
    )(x3, g, b)

    apply_kernel = functools.partial(_gn_apply_kernel, fused_fn=fused_fn)
    return pl.pallas_call(
        apply_kernel,
        out_shape=jax.ShapeDtypeStruct((N, C, HW), x3.dtype),
        grid_spec=pltpu.PrefetchScalarGridSpec(
            num_scalar_prefetch=0,
            grid=(N, n_t),
            in_specs=[
                pl.BlockSpec((pl.Squeezed(), C, tile_hw), lambda n, t: (n, 0, t)),
                pl.BlockSpec((pl.Squeezed(), C, 1), lambda n, t: (n, 0, 0)),
                pl.BlockSpec((pl.Squeezed(), C, 1), lambda n, t: (n, 0, 0)),
            ],
            out_specs=pl.BlockSpec((pl.Squeezed(), C, tile_hw),
                                   lambda n, t: (n, 0, t)),
        ),
        compiler_params=pltpu.CompilerParams(
            dimension_semantics=("parallel", "parallel"),
            vmem_limit_bytes=_VMEM_LIMIT,
        ),
    )(x3, scale, shift)


# ----------------------------------------------------------------------------
# Dispatch / public API.
# ----------------------------------------------------------------------------
def _full_sample_fits(C, HW, x_bytes):
    # double-buffered input + output blocks + f32 working copies of x and y.
    step_bytes = C * HW * (2 * x_bytes + 2 * x_bytes + 2 * 4)
    return step_bytes <= _FULL_SAMPLE_BUDGET


def _pick_tile_hw(HW, C, x_bytes, budget):
    """Largest divisor of HW that is a multiple of 128 and fits the step budget."""
    if HW % 128 != 0:
        return None
    best = None
    for k in range(1, HW // 128 + 1):
        if HW % k:
            continue
        t = HW // k
        if t % 128:
            continue
        step_bytes = C * t * (2 * x_bytes + 2 * x_bytes + 2 * 4)
        if step_bytes <= budget:
            return t
        best = t
    return best


def groupnorm1(x, gamma, beta, *, fused_fn=None, force_chunked=False, tile_hw=None):
    """GroupNorm(1, C) on NCHW x, with optional fused elementwise epilogue."""
    N, C, H, W = x.shape
    HW = H * W
    x3 = x.reshape(N, C, HW)                       # lane-dense layout
    g = gamma.reshape(C, 1).astype(jnp.float32)
    b = beta.reshape(C, 1).astype(jnp.float32)
    x_bytes = x.dtype.itemsize

    use_full = (not force_chunked) and _full_sample_fits(C, HW, x_bytes)
    if not use_full:
        if tile_hw is None:
            tile_hw = _pick_tile_hw(HW, C, x_bytes, _CHUNK_STEP_BUDGET)
        if tile_hw is None:
            use_full = True  # no clean 128-multiple tiling; fall back to full blocks

    if use_full:
        y3 = _groupnorm1_full(x3, g, b, fused_fn)
    else:
        y3 = _groupnorm1_chunked(x3, g, b, fused_fn, tile_hw)
    return y3.reshape(N, C, H, W)


def prenorm(x, gamma, beta, fn, *, fn_is_elementwise=False):
    """PreNorm.forward: fn(GroupNorm(1, dim)(x)).

    If fn is elementwise it is fused into the kernel epilogue (saves one full
    HBM round-trip); otherwise it runs as ordinary JAX on the kernel output.
    """
    if fn is None:
        return groupnorm1(x, gamma, beta)
    if fn_is_elementwise:
        return groupnorm1(x, gamma, beta, fused_fn=fn)
    return fn(groupnorm1(x, gamma, beta))


# ----------------------------------------------------------------------------
# Reference + self-test.
# ----------------------------------------------------------------------------
def _reference_prenorm(x, gamma, beta, fn):
    xf = x.astype(jnp.float32)
    mean = jnp.mean(xf, axis=(1, 2, 3), keepdims=True)
    var = jnp.mean((xf - mean) ** 2, axis=(1, 2, 3), keepdims=True)
    xn = (xf - mean) * lax.rsqrt(var + _EPS)
    y = xn * gamma.reshape(1, -1, 1, 1) + beta.reshape(1, -1, 1, 1)
    return fn(y).astype(x.dtype)


if __name__ == "__main__":
    key = jax.random.PRNGKey(0)
    kx, kg, kb = jax.random.split(key, 3)

    N, C, H, W = 2, 4, 16, 16
    x = jax.random.normal(kx, (N, C, H, W), dtype=jnp.float32)
    gamma = 1.0 + 0.1 * jax.random.normal(kg, (C,), dtype=jnp.float32)
    beta = 0.1 * jax.random.normal(kb, (C,), dtype=jnp.float32)

    # `fn` is an arbitrary callable in the PyTorch module; elementwise here.
    fn = jax.nn.gelu
    ref = _reference_prenorm(x, gamma, beta, fn)

    # 1) Fast path: whole-sample block, lane-dense, fn fused into the epilogue.
    out = jax.block_until_ready(prenorm(x, gamma, beta, fn, fn_is_elementwise=True))
    assert out.shape == (N, C, H, W)
    assert jnp.allclose(out, ref, atol=2e-5, rtol=2e-5), "full-sample path mismatch"

    # 2) Arbitrary (non-fusable) fn path: fn applied outside the kernel.
    out2 = jax.block_until_ready(prenorm(x, gamma, beta, fn))
    assert jnp.allclose(out2, ref, atol=2e-5, rtol=2e-5), "unfused-fn path mismatch"

    # 3) Chunked (large-sample / tight-VMEM) path, forced here with 128-lane tiles.
    out3 = jax.block_until_ready(
        groupnorm1(x, gamma, beta, fused_fn=fn, force_chunked=True, tile_hw=128))
    assert jnp.allclose(out3, ref, atol=2e-5, rtol=2e-5), "chunked path mismatch"

    print("KERNEL_OK")
</pallas_src>

<mosaic_0001>
module attributes {stable_mosaic.version = 11 : i64} {
  func.func @_gn_full_kernel(%arg0: i32, %arg1: memref<1x4x256xf32, #tpu.memory_space<vmem>>, %arg2: memref<4x1xf32, #tpu.memory_space<vmem>>, %arg3: memref<4x1xf32, #tpu.memory_space<vmem>>, %arg4: memref<1x4x256xf32, #tpu.memory_space<vmem>>) attributes {dimension_semantics = [#tpu.dimension_semantics<parallel>], iteration_bounds = array<i64: 2>, scalar_prefetch = 0 : i64, scratch_operands = 0 : i64, tpu.core_type = #tpu.core_type<tc>, window_params = [{transform_indices = @transform_0, window_bounds = array<i64: 1, 4, 256>}, {pipeline_mode = #tpu.pipeline_mode<synchronous>, transform_indices = @transform_1, window_bounds = array<i64: 4, 1>}, {pipeline_mode = #tpu.pipeline_mode<synchronous>, transform_indices = @transform_2, window_bounds = array<i64: 4, 1>}, {transform_indices = @transform_3, window_bounds = array<i64: 1, 4, 256>}]} {
    %c0 = arith.constant 0 : index
    %c0_0 = arith.constant 0 : index
    %c0_1 = arith.constant 0 : index
    %0 = vector.load %arg1[%c0, %c0_0, %c0_1] : memref<1x4x256xf32, #tpu.memory_space<vmem>>, vector<1x4x256xf32>
    %1 = vector.shape_cast %0 : vector<1x4x256xf32> to vector<4x256xf32>
    %2 = vector.shape_cast %1 : vector<4x256xf32> to vector<1x4x256xf32>
    %cst = arith.constant dense<0.000000e+00> : vector<1xf32>
    %3 = vector.multi_reduction <add>, %2, %cst [1, 2] : vector<1x4x256xf32> to vector<1xf32>
    %4 = vector.shape_cast %3 : vector<1xf32> to vector<1x1x1xf32>
    %5 = vector.extract %4[0, 0, 0] : f32 from vector<1x1x1xf32>
    %6 = arith.mulf %1, %1 : vector<4x256xf32>
    %7 = vector.shape_cast %6 : vector<4x256xf32> to vector<1x4x256xf32>
    %cst_2 = arith.constant dense<0.000000e+00> : vector<1xf32>
    %8 = vector.multi_reduction <add>, %7, %cst_2 [1, 2] : vector<1x4x256xf32> to vector<1xf32>
    %9 = vector.shape_cast %8 : vector<1xf32> to vector<1x1x1xf32>
    %10 = vector.extract %9[0, 0, 0] : f32 from vector<1x1x1xf32>
    %cst_3 = arith.constant 9.765625E-4 : f32
    %11 = arith.mulf %5, %cst_3 : f32
    %cst_4 = arith.constant 9.765625E-4 : f32
    %12 = arith.mulf %10, %cst_4 : f32
    %13 = arith.mulf %11, %11 : f32
    %14 = arith.subf %12, %13 : f32
    %cst_5 = arith.constant 9.99999974E-6 : f32
    %15 = arith.addf %14, %cst_5 : f32
    %16 = math.rsqrt %15 : f32
    %c0_6 = arith.constant 0 : index
    %c0_7 = arith.constant 0 : index
    %17 = vector.load %arg2[%c0_6, %c0_7] : memref<4x1xf32, #tpu.memory_space<vmem>>, vector<4x1xf32>
    %18 = vector.broadcast %16 : f32 to vector<4x1xf32>
    %19 = arith.mulf %17, %18 : vector<4x1xf32>
    %c0_8 = arith.constant 0 : index
    %c0_9 = arith.constant 0 : index
    %20 = vector.load %arg3[%c0_8, %c0_9] : memref<4x1xf32, #tpu.memory_space<vmem>>, vector<4x1xf32>
    %21 = vector.broadcast %11 : f32 to vector<4x1xf32>
    %22 = arith.mulf %21, %19 : vector<4x1xf32>
    %23 = arith.subf %20, %22 : vector<4x1xf32>
    %24 = vector.broadcast %19 : vector<4x1xf32> to vector<4x256xf32>
    %25 = arith.mulf %1, %24 : vector<4x256xf32>
    %26 = vector.broadcast %23 : vector<4x1xf32> to vector<4x256xf32>
    %27 = arith.addf %25, %26 : vector<4x256xf32>
    %28 = arith.mulf %27, %27 : vector<4x256xf32>
    %29 = arith.mulf %27, %28 : vector<4x256xf32>
    %cst_10 = arith.constant 4.471500e-02 : f32
    %30 = vector.broadcast %cst_10 : f32 to vector<4x256xf32>
    %31 = arith.mulf %30, %29 : vector<4x256xf32>
    %32 = arith.addf %27, %31 : vector<4x256xf32>
    %cst_11 = arith.constant 0.797884583 : f32
    %33 = vector.broadcast %cst_11 : f32 to vector<4x256xf32>
    %34 = arith.mulf %33, %32 : vector<4x256xf32>
    %35 = math.tanh %34 : vector<4x256xf32>
    %cst_12 = arith.constant 1.000000e+00 : f32
    %36 = vector.broadcast %cst_12 : f32 to vector<4x256xf32>
    %37 = arith.addf %36, %35 : vector<4x256xf32>
    %cst_13 = arith.constant 5.000000e-01 : f32
    %38 = vector.broadcast %cst_13 : f32 to vector<4x256xf32>
    %39 = arith.mulf %38, %37 : vector<4x256xf32>
    %40 = arith.mulf %27, %39 : vector<4x256xf32>
    %c0_14 = arith.constant 0 : index
    %c0_15 = arith.constant 0 : index
    %c0_16 = arith.constant 0 : index
    %41 = vector.load %arg4[%c0_14, %c0_15, %c0_16] : memref<1x4x256xf32, #tpu.memory_space<vmem>>, vector<1x4x256xf32>
    %42 = vector.shape_cast %41 : vector<1x4x256xf32> to vector<4x256xf32>
    %43 = vector.shape_cast %40 : vector<4x256xf32> to vector<1x4x256xf32>
    tpu.vector_store %arg4[%c0_14, %c0_15, %c0_16], %43 {strides = array<i32>} : memref<1x4x256xf32, #tpu.memory_space<vmem>>, vector<1x4x256xf32>,
    return
  }
  func.func @transform_0(%arg0: i32) -> (i32, i32, i32) {
    %c0_i32 = arith.constant 0 : i32
    %c0_i32_0 = arith.constant 0 : i32
    %c0_i32_1 = arith.constant 0 : i32
    return %arg0, %c0_i32, %c0_i32_0 : i32, i32, i32
  }
  func.func @transform_1(%arg0: i32) -> (i32, i32) {
    %c0_i32 = arith.constant 0 : i32
    %c0_i32_0 = arith.constant 0 : i32
    %c0_i32_1 = arith.constant 0 : i32
    return %c0_i32, %c0_i32_0 : i32, i32
  }
  func.func @transform_2(%arg0: i32) -> (i32, i32) {
    %c0_i32 = arith.constant 0 : i32
    %c0_i32_0 = arith.constant 0 : i32
    %c0_i32_1 = arith.constant 0 : i32
    return %c0_i32, %c0_i32_0 : i32, i32
  }
  func.func @transform_3(%arg0: i32) -> (i32, i32, i32) {
    %c0_i32 = arith.constant 0 : i32
    %c0_i32_0 = arith.constant 0 : i32
    %c0_i32_1 = arith.constant 0 : i32
    return %arg0, %c0_i32, %c0_i32_0 : i32, i32, i32
  }
}

</mosaic_0001>

<llo_original>
// kernel: tpu_custom_call.1
$region0: #{tpu_custom_call.1}
  #allocation0 [shape = 'u32[]', space=smem, size = 0x4, offset = 0x4, fixed_abs, tag = 'smem constant byte address 0x4 - core index']
  #allocation1 [shape = 'u32[72,128]{1,0:T(1,128)}', space=vmem, size = 0x9000, scoped, tag = 'internal scratch']
  %s0 = inlined_call_operand.hbm [shape: f32[2,4,256], index: 0, kind: input, shape index: {}]
  %s1 = inlined_call_operand.vmem [shape: f32[4,1], index: 1, kind: input, shape index: {}]
  %s2 = inlined_call_operand.vmem [shape: f32[4,1], index: 2, kind: input, shape index: {}]
  %s3 = inlined_call_operand.hbm [shape: f32[2,4,256], index: 3, kind: output, shape index: {}]
  %s4 = sld [smem:[#allocation0]]
  $region49: #{tpu_custom_call.1} parent=0
    _
  %s6 = ssub.s32 1, %s4
  %s7 = scalar_select 0, %s6, %s4
  $region1: #{tpu_custom_call.1} parent=0
    #allocation2 [shape = 'u8[8192]{0}', space=vmem, size = 0x2000, scoped, tag = 'input window, operand 0']
    #allocation3 [shape = 's32[2]{0}', space=sflag, size = 0x8, scoped, tag = 'scoped memory for tpu_custom_call.1']
    #allocation4 [shape = 's32[2]{0}', space=sflag, size = 0x8, scoped, tag = 'scoped memory for tpu_custom_call.1']
    #allocation5 [shape = 'u8[8192]{0}', space=vmem, size = 0x2000, scoped, tag = 'output window, operand 0']
    %8 = vsyncpa [#allocation3], 0
    %s9 = scalar_lea.sflag [#allocation3], 1
    %10 = vsyncpa %s9, 0
    %11 = vsyncpa [#allocation4], 0
    %s12 = scalar_lea.sflag [#allocation4], 1
    %13 = vsyncpa %s12, 0
    loop: start=0, step=1, limit=4
    $region2: #{tpu_custom_call.1} parent=1 // loop_pre_header
      _
    $region3: #{tpu_custom_call.1} parent=1 // loop_header
      %s15 = sphi 0, %s19
      %p16 = scmp.ge.s32.totalorder %s15, 4
      %s25 = sphi 0, %s27
      %s28 = sphi 0, %s25
      %s29 = sphi 0, %s28
      %s45 = sphi 0, %s29
      %s49 = sphi 0, %s49
      %s51 = sphi 0, %s49
      %s52 = sphi 0, %s51
      %s66 = sphi 0, %s52
      %s70 = sphi 0, %s70
      %s72 = sphi 0, %s70
      %s73 = sphi 0, %s72
      %s87 = sphi 0, %s73
      %s93 = sphi 0, %s95
      %s96 = sphi 0, %s93
      %s97 = sphi 0, %s96
      %s113 = sphi 0, %s97
    $region4: #{tpu_custom_call.1} parent=1 // loop_header_branch
      %18 = sbr.rel (%p16) target = $region8
    $region5: #{tpu_custom_call.1} parent=1 // loop_body
      %s20 = ssub.s32 %s15, 1
      %s21 = ssub.s32 %s15, 2
      %s22 = sadd.s32 %s15, 1
      %s23 = ssub.s32 %s15, %s22
      %p24 = scmp.eq.s32.totalorder %s23, 0
      %s26 = sadd.s32 %s25, 1
      %s27 = scalar_select %p24, %s25, %s26
      %p30 = pneg %p24
      %p31 = scmp.eq.s32.totalorder %s15, 1
      %p32 = por %p30, %p31
      %p33 = scmp.ne.s32.totalorder %s25, %s28
      %p34 = scmp.eq.s32.totalorder %s15, 0
      %p35 = por %p33, %p34
      %p36 = scmp.ne.s32.totalorder %s25, %s28
      %p37 = scmp.eq.s32.totalorder %s20, 1
      %p38 = por %p36, %p37
      %p39 = scmp.ne.s32.totalorder %s28, %s29
      %p40 = scmp.eq.s32.totalorder %s20, 0
      %p41 = por %p39, %p40
      %p42 = scmp.ne.s32.totalorder %s28, %s29
      %p43 = scmp.eq.s32.totalorder %s21, 1
      %p44 = por %p42, %p43
      %p46 = scmp.ne.s32.totalorder %s29, %s45
      %p47 = scmp.eq.s32.totalorder %s21, 0
      %p48 = por %p46, %p47
      %s50 = sadd.s32 %s49, 1
      %p53 = scmp.eq.s32.totalorder %s15, 1
      %p54 = scmp.ne.s32.totalorder %s49, %s51
      %p55 = scmp.eq.s32.totalorder %s15, 0
      %p56 = por %p54, %p55
      %p57 = scmp.ne.s32.totalorder %s49, %s51
      %p58 = scmp.eq.s32.totalorder %s20, 1
      %p59 = por %p57, %p58
      %p60 = scmp.ne.s32.totalorder %s51, %s52
      %p61 = scmp.eq.s32.totalorder %s20, 0
      %p62 = por %p60, %p61
      %p63 = scmp.ne.s32.totalorder %s51, %s52
      %p64 = scmp.eq.s32.totalorder %s21, 1
      %p65 = por %p63, %p64
      %p67 = scmp.ne.s32.totalorder %s52, %s66
      %p68 = scmp.eq.s32.totalorder %s21, 0
      %p69 = por %p67, %p68
      %s71 = sadd.s32 %s70, 1
      %p74 = scmp.eq.s32.totalorder %s15, 1
      %p75 = scmp.ne.s32.totalorder %s70, %s72
      %p76 = scmp.eq.s32.totalorder %s15, 0
      %p77 = por %p75, %p76
      %p78 = scmp.ne.s32.totalorder %s70, %s72
      %p79 = scmp.eq.s32.totalorder %s20, 1
      %p80 = por %p78, %p79
      %p81 = scmp.ne.s32.totalorder %s72, %s73
      %p82 = scmp.eq.s32.totalorder %s20, 0
      %p83 = por %p81, %p82
      %p84 = scmp.ne.s32.totalorder %s72, %s73
      %p85 = scmp.eq.s32.totalorder %s21, 1
      %p86 = por %p84, %p85
      %p88 = scmp.ne.s32.totalorder %s73, %s87
      %p89 = scmp.eq.s32.totalorder %s21, 0
      %p90 = por %p88, %p89
      %s91 = ssub.s32 %s15, %s22
      %p92 = scmp.eq.s32.totalorder %s91, 0
      %s94 = sadd.s32 %s93, 1
      %s95 = scalar_select %p92, %s93, %s94
      %p98 = pneg %p92
      %p99 = scmp.eq.s32.totalorder %s15, 1
      %p100 = por %p98, %p99
      %p101 = scmp.ne.s32.totalorder %s93, %s96
      %p102 = scmp.eq.s32.totalorder %s15, 0
      %p103 = por %p101, %p102
      %p104 = scmp.ne.s32.totalorder %s93, %s96
      %p105 = scmp.eq.s32.totalorder %s20, 1
      %p106 = por %p104, %p105
      %p107 = scmp.ne.s32.totalorder %s96, %s97
      %p108 = scmp.eq.s32.totalorder %s20, 0
      %p109 = por %p107, %p108
      %p110 = scmp.ne.s32.totalorder %s96, %s97
      %p111 = scmp.eq.s32.totalorder %s21, 1
      %p112 = por %p110, %p111
      %p114 = scmp.ne.s32.totalorder %s97, %s113
      %p115 = scmp.eq.s32.totalorder %s21, 0
      %p116 = por %p114, %p115
      %p117 = scmp.le.s32.totalorder 1, %s15
      %p118 = scmp.lt.s32.totalorder %s15, 3
      %p119 = pnand %p117, %p118
      %p120 = pneg %p119
      // Predicated region
      $region9: #{tpu_custom_call.1} parent=5 // pred_check
        _
      $region10: #{tpu_custom_call.1} parent=5 // pred_check_branch
        %122 = sbr.rel (%p119) target = $region12
      $region11: #{tpu_custom_call.1} parent=5 // pred_region
        %s123 = ssub.s32 %s15, 1
        // Predicated region
        $region13: #{tpu_custom_call.1} parent=11 // pred_check
          %p124 = pneg %p62
        $region14: #{tpu_custom_call.1} parent=11 // pred_check_branch
          %126 = sbr.rel (%p124) target = $region16
        $region15: #{tpu_custom_call.1} parent=11 // pred_region
          _
        $region16: #{tpu_custom_call.1} parent=11 // pred_fallthru
          _
        // Predicated region
        $region17: #{tpu_custom_call.1} parent=11 // pred_check
          %p127 = pneg %p83
        $region18: #{tpu_custom_call.1} parent=11 // pred_check_branch
          %129 = sbr.rel (%p127) target = $region20
        $region19: #{tpu_custom_call.1} parent=11 // pred_region
          _
        $region20: #{tpu_custom_call.1} parent=11 // pred_fallthru
          _
      $region12: #{tpu_custom_call.1} parent=5 // pred_fallthru
        _
      %p130 = scmp.lt.s32.totalorder %s15, 2
      // Predicated region
      $region21: #{tpu_custom_call.1} parent=5 // pred_check
        %p131 = pneg %p130
      $region22: #{tpu_custom_call.1} parent=5 // pred_check_branch
        %133 = sbr.rel (%p131) target = $region24
      $region23: #{tpu_custom_call.1} parent=5 // pred_region
        // Predicated region
        $region25: #{tpu_custom_call.1} parent=23 // pred_check
          %p134 = pneg %p35
        $region26: #{tpu_custom_call.1} parent=23 // pred_check_branch
          %136 = sbr.rel (%p134) target = $region28
        $region27: #{tpu_custom_call.1} parent=23 // pred_region
          %s137 = sand.u32 %s25, 1
          %s138 = scalar_lea.sflag [#allocation3], %s137
          %s139 = sand.u32 %s25, 1
          %s140 = smul.addr %s139, 8
          %s141 = scalar_lea.vmem [#allocation2], %s140
          %143 = vsyncadd %s138, 0
          %s144 = smul.addr %s15, 2
          %s145 = smul.addr %s144, 4
          %s146 = scalar_lea.hbm %s0, %s145
          %s148 = sshll.u32 %s146, 4
          %s149 = int_to_ptr.hbm [resolvable:$true] %s148
          %s150 = sshll.u32 %s141, 4
          %s151 = int_to_ptr.vmem [resolvable:$true] %s150
          %153 = dma.hbm_to_vmem [thread:$0]  %s149, 128, %s151, %s138
        $region28: #{tpu_custom_call.1} parent=23 // pred_fallthru
          _
      $region24: #{tpu_custom_call.1} parent=5 // pred_fallthru
        _
      %p154 = scmp.le.s32.totalorder 1, %s15
      %p155 = scmp.lt.s32.totalorder %s15, 3
      %p156 = pnand %p154, %p155
      %p157 = pneg %p156
      // Predicated region
      $region29: #{tpu_custom_call.1} parent=5 // pred_check
        _
      $region30: #{tpu_custom_call.1} parent=5 // pred_check_branch
        %159 = sbr.rel (%p156) target = $region32
      $region31: #{tpu_custom_call.1} parent=5 // pred_region
        %s160 = ssub.s32 %s15, 1
        %s161 = sand.u32 %s28, 1
        %s162 = scalar_lea.sflag [#allocation3], %s161
        %s163 = sand.u32 %s28, 1
        %s164 = smul.addr %s163, 8
        %s165 = scalar_lea.vmem [#allocation2], %s164
        // Predicated region
        $region33: #{tpu_custom_call.1} parent=31 // pred_check
          %p166 = pneg %p41
        $region34: #{tpu_custom_call.1} parent=31 // pred_check_branch
          %168 = sbr.rel (%p166) target = $region36
        $region35: #{tpu_custom_call.1} parent=31 // pred_region
          %170 = dma.done %s162, 128
        $region36: #{tpu_custom_call.1} parent=31 // pred_fallthru
          _
        %s171 = sand.u32 %s28, 1
        %s172 = scalar_lea.sflag [#allocation3], %s171
        %s173 = sand.u32 %s28, 1
        %s174 = smul.addr %s173, 8
        %s175 = scalar_lea.vmem [#allocation2], %s174
        %p176 = pneg %p41
        %p177 = pneg %p38
        %p178 = pneg %p62
        %p179 = pneg %p59
        %p180 = pneg %p83
        %p181 = pneg %p80
        %p182 = pneg %p109
        %p183 = pneg %p106
        %s184 = sand.u32 %s96, 1
        %s185 = scalar_lea.sflag [#allocation4], %s184
        %s186 = sand.u32 %s96, 1
        %s187 = smul.addr %s186, 8
        %s188 = scalar_lea.vmem [#allocation5], %s187
        %v189 = vld [vmem:[%s165] sm:$0xff]
        %191 = vst [vmem:[#allocation1] ss:$2 sm:$0xff] %v189
        %v192 = vld.sshfl [vmem:[#allocation1] sm:$0xff pattern:$0x75316420]
        %v193 = vld.sshfl [vmem:[#allocation1 + $0x8] sm:$0xff pattern:$0x75316420]
        %vm196 = vcmask 1043456
        %v197 = vsel %vm196, %v192, 0.0
        %v198 = vsel %vm196, %v193, 0.0
        %v199 = vadd.f32 %v197, %v198
        %200 = vadd.xlane.f32.xlu0 %v199
        %v201 = vpop.xlane.xlu0 %200
        %v202 = vrot.slane %v201, 4
        %v203 = vadd.f32 %v201, %v202
        %v204 = vrot.slane %v203, 2
        %v205 = vadd.f32 %v203, %v204
        %v206 = vrot.slane %v205, 1
        %v207 = vadd.f32 %v205, %v206
        %s208 = vtos %v207
        %v209 = vmul.f32 %v189, %v189
        %211 = vst [vmem:[#allocation1] ss:$2 sm:$0xff] %v209
        %v212 = vld.sshfl [vmem:[#allocation1] sm:$0xff pattern:$0x75316420]
        %v213 = vld.sshfl [vmem:[#allocation1 + $0x8] sm:$0xff pattern:$0x75316420]
        %v216 = vsel %vm196, %v212, 0.0
        %v217 = vsel %vm196, %v213, 0.0
        %v218 = vadd.f32 %v216, %v217
        %219 = vadd.xlane.f32.xlu0 %v218
        %v220 = vpop.xlane.xlu0 %219
        %v221 = vrot.slane %v220, 4
        %v222 = vadd.f32 %v220, %v221
        %v223 = vrot.slane %v222, 2
        %v224 = vadd.f32 %v222, %v223
        %v225 = vrot.slane %v224, 1
        %v226 = vadd.f32 %v224, %v225
        %s227 = vtos %v226
        %s228 = smul.f32 %s208, 0.0009765625
        %s229 = smul.f32 %s227, 0.0009765625
        %s230 = smul.f32 %s228, %s228
        %s231 = ssub.f32 %s229, %s230
        %s232 = sadd.f32 %s231, 1e-05
        %v233 = vstv %s232
        %v234 = vrsqrt.pop %v233
        %v235 = vmul.f32 %v234, %v233
        %v236 = vmul.f32 %v235, %v234
        %v237 = vmul.f32 0.5, %v236
        %v238 = vsub.f32 1.5, %v237
        %v239 = vmul.f32 %v234, %v238
        %vm240 = vweird.f32 %v233
        %vm241 = vweird.f32 %v234
        %vm242 = vmor %vm240, %vm241
        %v243 = vsel %vm242, %v234, %v239
        %s244 = vtos %v243
        %v245 = vld [vmem:[%s1] sm:$0xf]
        %v246 = vstv %s244
        %v247 = vmul.f32 %v245, %v246
        %v248 = vld [vmem:[%s2] sm:$0xf]
        %v249 = vstv %s228
        %v250 = vmul.f32 %v249, %v247
        %v251 = vsub.f32 %v248, %v250
        %253 = vset.pattern.permute.xlu0 0
        %254 = vperm.xlu0 %253, %v247
        %v255 = vpop.permute.xlu0 %254
        %v257 = vunpack.c.l.s4 839922192
        %v258 = vunpack.c.0.s8 %v257
        %v259 = vperm.slane %v255, %v258
        %v261 = vmul.f32 %v189, %v259
        %263 = vset.pattern.permute.xlu0 0
        %264 = vperm.xlu0 %263, %v251
        %v265 = vpop.permute.xlu0 %264
        %v267 = vunpack.c.l.s4 839922192
        %v268 = vunpack.c.0.s8 %v267
        %v269 = vperm.slane %v265, %v268
        %v271 = vadd.f32 %v261, %v269
        %v272 = vmul.f32 %v271, %v271
        %v273 = vmul.f32 %v271, %v272
        %v274 = vmul.f32 %v273, 0.044715
        %v275 = vadd.f32 %v271, %v274
        %v276 = vmul.f32 %v275, 0.7978846
        %v277 = vtanh.pop %v276
        %v278 = vadd.f32 %v277, 1.0
        %v279 = vmul.f32 %v278, 0.5
        %v280 = vmul.f32 %v271, %v279
        %281 = vst [vmem:[%s188] sm:$0xff] %v280
        %s282 = sand.u32 %s96, 1
        %s283 = scalar_lea.sflag [#allocation4], %s282
        %s284 = sand.u32 %s96, 1
        %s285 = smul.addr %s284, 8
        %s286 = scalar_lea.vmem [#allocation5], %s285
        // Predicated region
        $region37: #{tpu_custom_call.1} parent=31 // pred_check
          %p287 = pneg %p106
        $region38: #{tpu_custom_call.1} parent=31 // pred_check_branch
          %289 = sbr.rel (%p287) target = $region40
        $region39: #{tpu_custom_call.1} parent=31 // pred_region
          %291 = vsyncadd %s283, 0
          %s292 = smul.addr %s20, 2
          %s293 = smul.addr %s292, 4
          %s294 = scalar_lea.hbm %s3, %s293
          %s296 = sshll.u32 %s286, 4
          %s297 = int_to_ptr.vmem [resolvable:$true] %s296
          %s298 = sshll.u32 %s294, 4
          %s299 = int_to_ptr.hbm [resolvable:$true] %s298
          %301 = dma.vmem_to_hbm [thread:$0]  %s297, 128, %s299, %s283
        $region40: #{tpu_custom_call.1} parent=31 // pred_fallthru
          _
      $region32: #{tpu_custom_call.1} parent=5 // pred_fallthru
        _
      %p302 = scmp.le.s32.totalorder 2, %s15
      // Predicated region
      $region41: #{tpu_custom_call.1} parent=5 // pred_check
        %p303 = pneg %p302
      $region42: #{tpu_custom_call.1} parent=5 // pred_check_branch
        %305 = sbr.rel (%p303) target = $region44
      $region43: #{tpu_custom_call.1} parent=5 // pred_region
        %s306 = ssub.s32 %s15, 2
        // Predicated region
        $region45: #{tpu_custom_call.1} parent=43 // pred_check
          %p307 = pneg %p112
        $region46: #{tpu_custom_call.1} parent=43 // pred_check_branch
          %309 = sbr.rel (%p307) target = $region48
        $region47: #{tpu_custom_call.1} parent=43 // pred_region
          %s310 = sand.u32 %s97, 1
          %s311 = scalar_lea.sflag [#allocation4], %s310
          %s312 = sand.u32 %s97, 1
          %s313 = smul.addr %s312, 8
          %s314 = scalar_lea.vmem [#allocation5], %s313
          %316 = dma.done %s311, 128
        $region48: #{tpu_custom_call.1} parent=43 // pred_fallthru
          _
      $region44: #{tpu_custom_call.1} parent=5 // pred_fallthru
        _
    $region6: #{tpu_custom_call.1} parent=1 // loop_footer
      %s19 = sadd.s32 1, %s15
    $region7: #{tpu_custom_call.1} parent=1 // loop_footer_branch
      %14 = sbr.rel target = $region3
    $region8: #{tpu_custom_call.1} parent=1 // loop_exit
      _
    %317 = vsyncpa [#allocation3], 1
    %s318 = scalar_lea.sflag [#allocation3], 1
    %319 = vsyncpa %s318, 1
    %320 = vsyncpa [#allocation4], 1
    %s321 = scalar_lea.sflag [#allocation4], 1
    %322 = vsyncpa %s321, 1

</llo_original>
